<compile_context>
chip_gen: v7x
topology: tpu7x:2x2x1
jax: 0.10.0
libtpu: 0.0.40
codegen_flags: <defaults>
</compile_context>

<pallas_src>
import functools

import jax
import jax.numpy as jnp
from jax.experimental import pallas as pl
from jax.experimental.pallas import tpu as pltpu


def _round_up(x, m):
    return (x + m - 1) // m * m


def _rel_unit_kernel(a_ref, b_ref, w_ref, o_ref, acc_ref, *, inv_heads):
    # Grid: (batch_tiles [parallel], e_tiles [arbitrary]).
    # a_ref: (TILE_B, d)       embed_a  (resident across the contraction axis)
    # b_ref: (TILE_B, TILE_E)  embed_b slice along the contraction dim
    # w_ref: (TILE_E, d)       pre-summed weights slice (rows = contraction dim)
    # o_ref: (TILE_B, 1)       sim score (f32)
    # acc_ref: VMEM (TILE_B, d) f32 accumulator for proj = embed_b @ W_sum
    k = pl.program_id(1)

    @pl.when(k == 0)
    def _():
        acc_ref[...] = jnp.zeros_like(acc_ref)

    # MXU push, f32 accumulation; no transpose anywhere.
    acc_ref[...] += jnp.dot(b_ref[...], w_ref[...],
                            preferred_element_type=jnp.float32)

    @pl.when(k == pl.num_programs(1) - 1)
    def _():
        a = a_ref[...].astype(jnp.float32)
        sim = jnp.sum(a * acc_ref[...], axis=-1, keepdims=True) * inv_heads
        o_ref[...] = sim.astype(o_ref.dtype)


def rel_unit_forward(embed_a, embed_b, weights):
    """embed_a, embed_b: (B, d); weights: (H, d, d) torch-Linear layout (y = x @ W.T).

    Returns sim_score: (B,) float32.
    """
    B, d = embed_a.shape
    H = weights.shape[0]

    # ---- fold the head sum into the (frozen) weights: sum_h W_h ----
    w_sum = jnp.sum(weights.astype(jnp.float32), axis=0).astype(weights.dtype)
    w_itemsize = jnp.dtype(w_sum.dtype).itemsize
    x_itemsize = jnp.dtype(embed_a.dtype).itemsize

    # ---- tile selection ----
    TILE_B = min(128, _round_up(B, 8))          # sublane-aligned batch tile
    B_pad = _round_up(B, TILE_B)

    # Contraction-dim (rows of W_sum / features of embed_b) tiling keeps the
    # double/triple-buffered weight block within a conservative VMEM budget.
    weight_block_budget = 8 * 1024 * 1024       # bytes per weight block
    full_e = _round_up(d, 8)
    if full_e * d * w_itemsize <= weight_block_budget:
        TILE_E = full_e                         # single contraction step
    else:
        TILE_E = max(128, (weight_block_budget // (d * w_itemsize)) // 128 * 128)
    E_pad = _round_up(d, TILE_E)
    num_b_tiles = B_pad // TILE_B
    num_e_tiles = E_pad // TILE_E

    # ---- zero-pad to tile boundaries (padding contributes 0 to the score) ----
    if B_pad != B:
        embed_a = jnp.pad(embed_a, ((0, B_pad - B), (0, 0)))
        embed_b = jnp.pad(embed_b, ((0, B_pad - B), (0, 0)))
    if E_pad != d:
        embed_b = jnp.pad(embed_b, ((0, 0), (0, E_pad - d)))
        w_sum = jnp.pad(w_sum, ((0, E_pad - d), (0, 0)))

    # Deeper weight pipeline only when there are enough contraction steps to
    # hide DMA latency (helps most on v5e's lower HBM bandwidth).
    if num_e_tiles >= 3:
        w_buffers = 3
        w_spec = pl.BlockSpec((TILE_E, d), lambda i, k: (k, 0),
                              pipeline_mode=pl.Buffered(3))
    else:
        w_buffers = 2
        w_spec = pl.BlockSpec((TILE_E, d), lambda i, k: (k, 0))

    # ---- explicit VMEM budget (respect v7x's 64 MiB physical VMEM) ----
    vmem_bytes = (2 * TILE_B * d * x_itemsize          # embed_a blocks
                  + 2 * TILE_B * TILE_E * x_itemsize   # embed_b blocks
                  + w_buffers * TILE_E * d * w_itemsize  # weight blocks
                  + 2 * TILE_B * 4                     # output blocks
                  + TILE_B * d * 4)                    # f32 accumulator
    vmem_limit = int(min(max(2 * vmem_bytes, 32 * 1024 * 1024), 64 * 1024 * 1024))

    kernel = functools.partial(_rel_unit_kernel, inv_heads=1.0 / H)

    out = pl.pallas_call(
        kernel,
        out_shape=jax.ShapeDtypeStruct((B_pad, 1), jnp.float32),
        grid_spec=pltpu.PrefetchScalarGridSpec(
            num_scalar_prefetch=0,
            grid=(num_b_tiles, num_e_tiles),
            in_specs=[
                pl.BlockSpec((TILE_B, d), lambda i, k: (i, 0)),       # embed_a
                pl.BlockSpec((TILE_B, TILE_E), lambda i, k: (i, k)),  # embed_b
                w_spec,                                               # sum_h W_h
            ],
            out_specs=pl.BlockSpec((TILE_B, 1), lambda i, k: (i, 0)),
            scratch_shapes=[pltpu.VMEM((TILE_B, d), jnp.float32)],
        ),
        compiler_params=pltpu.CompilerParams(
            dimension_semantics=("parallel", "arbitrary"),
            vmem_limit_bytes=vmem_limit,
        ),
    )(embed_a, embed_b, w_sum)

    return out[:B, 0]


def init_rel_unit_params(key, d, num_heads=3, dtype=jnp.float32):
    # Deterministic init mimicking nn.Linear default (uniform in [-1/sqrt(d), 1/sqrt(d)]).
    bound = 1.0 / (d ** 0.5)
    return jax.random.uniform(key, (num_heads, d, d), dtype=dtype,
                              minval=-bound, maxval=bound)


def _reference(embed_a, embed_b, weights):
    # Pure-JAX reference with the exact torch-module semantics.
    H = weights.shape[0]
    proj = jnp.einsum("bd,hed->bhe", embed_a, weights)            # per-head Linear
    return jnp.sum(proj * embed_b[:, None, :], axis=(1, 2)) / H   # batch_dot of concats / H


if __name__ == "__main__":
    key = jax.random.PRNGKey(0)

    # Primary small config matching the module defaults.
    B, d, H = 2, 32, 3
    k_w, k_a, k_b, key = jax.random.split(key, 4)
    weights = init_rel_unit_params(k_w, d, num_heads=H)
    embed_a = jax.random.normal(k_a, (B, d), dtype=jnp.float32)
    embed_b = jax.random.normal(k_b, (B, d), dtype=jnp.float32)

    sim = rel_unit_forward(embed_a, embed_b, weights)
    jax.block_until_ready(sim)
    ref = _reference(embed_a, embed_b, weights)
    assert jnp.allclose(sim, ref, atol=1e-5, rtol=1e-5), (sim, ref)

    # Second config with non-tile-aligned batch to exercise the padding path.
    B2, d2 = 5, 48
    k_w2, k_a2, k_b2, key = jax.random.split(key, 4)
    weights2 = init_rel_unit_params(k_w2, d2, num_heads=H)
    embed_a2 = jax.random.normal(k_a2, (B2, d2), dtype=jnp.float32)
    embed_b2 = jax.random.normal(k_b2, (B2, d2), dtype=jnp.float32)

    sim2 = rel_unit_forward(embed_a2, embed_b2, weights2)
    jax.block_until_ready(sim2)
    ref2 = _reference(embed_a2, embed_b2, weights2)
    assert jnp.allclose(sim2, ref2, atol=1e-5, rtol=1e-5), (sim2, ref2)

    print("KERNEL_OK")
</pallas_src>

<mosaic_0001>
module attributes {stable_mosaic.version = 11 : i64} {
  func.func @_rel_unit_kernel(%arg0: i32, %arg1: i32, %arg2: memref<8x32xf32, #tpu.memory_space<vmem>>, %arg3: memref<8x32xf32, #tpu.memory_space<vmem>>, %arg4: memref<32x32xf32, #tpu.memory_space<vmem>>, %arg5: memref<8x1xf32, #tpu.memory_space<vmem>>, %arg6: memref<8x32xf32, #tpu.memory_space<vmem>>) attributes {dimension_semantics = [#tpu.dimension_semantics<parallel>, #tpu.dimension_semantics<arbitrary>], iteration_bounds = array<i64: 1, 1>, scalar_prefetch = 0 : i64, scratch_operands = 1 : i64, tpu.core_type = #tpu.core_type<tc>, window_params = [{transform_indices = @transform_0, window_bounds = array<i64: 8, 32>}, {transform_indices = @transform_1, window_bounds = array<i64: 8, 32>}, {transform_indices = @transform_2, window_bounds = array<i64: 32, 32>}, {transform_indices = @transform_3, window_bounds = array<i64: 8, 1>}]} {
    %c0_i32 = arith.constant 0 : i32
    %0 = arith.cmpi eq, %arg1, %c0_i32 : i32
    %1 = arith.extui %0 : i1 to i32
    %c0_i32_0 = arith.constant 0 : i32
    %2 = arith.cmpi ne, %1, %c0_i32_0 : i32
    scf.if %2 {
      %cst_10 = arith.constant 0.000000e+00 : f32
      %12 = vector.broadcast %cst_10 : f32 to vector<8x32xf32>
      %c0_11 = arith.constant 0 : index
      %c0_12 = arith.constant 0 : index
      %13 = vector.load %arg6[%c0_11, %c0_12] : memref<8x32xf32, #tpu.memory_space<vmem>>, vector<8x32xf32>
      tpu.vector_store %arg6[%c0_11, %c0_12], %12 {strides = array<i32>} : memref<8x32xf32, #tpu.memory_space<vmem>>, vector<8x32xf32>,
    } else {
    }
    %c0 = arith.constant 0 : index
    %c0_1 = arith.constant 0 : index
    %3 = vector.load %arg6[%c0, %c0_1] : memref<8x32xf32, #tpu.memory_space<vmem>>, vector<8x32xf32>
    %c0_2 = arith.constant 0 : index
    %c0_3 = arith.constant 0 : index
    %4 = vector.load %arg3[%c0_2, %c0_3] : memref<8x32xf32, #tpu.memory_space<vmem>>, vector<8x32xf32>
    %c0_4 = arith.constant 0 : index
    %c0_5 = arith.constant 0 : index
    %5 = vector.load %arg4[%c0_4, %c0_5] : memref<32x32xf32, #tpu.memory_space<vmem>>, vector<32x32xf32>
    %cst = arith.constant dense<0.000000e+00> : vector<8x32xf32>
    %6 = tpu.matmul %4, %5, %cst {dimension_numbers = #tpu.dot_dimension_numbers<[1], [0], [0], [1], [0, 0, 1, 1], [], []>} : vector<8x32xf32>, vector<32x32xf32>, vector<8x32xf32> -> vector<8x32xf32>
    %7 = arith.addf %3, %6 : vector<8x32xf32>
    %c0_6 = arith.constant 0 : index
    %c0_7 = arith.constant 0 : index
    %8 = vector.load %arg6[%c0_6, %c0_7] : memref<8x32xf32, #tpu.memory_space<vmem>>, vector<8x32xf32>
    tpu.vector_store %arg6[%c0_6, %c0_7], %7 {strides = array<i32>} : memref<8x32xf32, #tpu.memory_space<vmem>>, vector<8x32xf32>,
    %c0_i32_8 = arith.constant 0 : i32
    %9 = arith.cmpi eq, %arg1, %c0_i32_8 : i32
    %10 = arith.extui %9 : i1 to i32
    %c0_i32_9 = arith.constant 0 : i32
    %11 = arith.cmpi ne, %10, %c0_i32_9 : i32
    scf.if %11 {
      %c0_10 = arith.constant 0 : index
      %c0_11 = arith.constant 0 : index
      %12 = vector.load %arg2[%c0_10, %c0_11] : memref<8x32xf32, #tpu.memory_space<vmem>>, vector<8x32xf32>
      %c0_12 = arith.constant 0 : index
      %c0_13 = arith.constant 0 : index
      %13 = vector.load %arg6[%c0_12, %c0_13] : memref<8x32xf32, #tpu.memory_space<vmem>>, vector<8x32xf32>
      %14 = arith.mulf %12, %13 : vector<8x32xf32>
      %cst_14 = arith.constant dense<0.000000e+00> : vector<8xf32>
      %15 = vector.multi_reduction <add>, %14, %cst_14 [1] : vector<8x32xf32> to vector<8xf32>
      %16 = vector.shape_cast %15 : vector<8xf32> to vector<8x1xf32>
      %cst_15 = arith.constant 0.333333343 : f32
      %17 = vector.broadcast %cst_15 : f32 to vector<8x1xf32>
      %18 = arith.mulf %16, %17 : vector<8x1xf32>
      %c0_16 = arith.constant 0 : index
      %c0_17 = arith.constant 0 : index
      %19 = vector.load %arg5[%c0_16, %c0_17] : memref<8x1xf32, #tpu.memory_space<vmem>>, vector<8x1xf32>
      tpu.vector_store %arg5[%c0_16, %c0_17], %18 {strides = array<i32>} : memref<8x1xf32, #tpu.memory_space<vmem>>, vector<8x1xf32>,
    } else {
    }
    return
  }
  func.func @transform_0(%arg0: i32, %arg1: i32) -> (i32, i32) {
    %c0_i32 = arith.constant 0 : i32
    %c0_i32_0 = arith.constant 0 : i32
    return %arg0, %c0_i32 : i32, i32
  }
  func.func @transform_1(%arg0: i32, %arg1: i32) -> (i32, i32) {
    %c0_i32 = arith.constant 0 : i32
    return %arg0, %arg1 : i32, i32
  }
  func.func @transform_2(%arg0: i32, %arg1: i32) -> (i32, i32) {
    %c0_i32 = arith.constant 0 : i32
    %c0_i32_0 = arith.constant 0 : i32
    return %arg1, %c0_i32 : i32, i32
  }
  func.func @transform_3(%arg0: i32, %arg1: i32) -> (i32, i32) {
    %c0_i32 = arith.constant 0 : i32
    %c0_i32_0 = arith.constant 0 : i32
    return %arg0, %c0_i32 : i32, i32
  }
}

</mosaic_0001>

<llo_original>
// kernel: tpu_custom_call.1
$region0: #{tpu_custom_call.1}
  #allocation0 [shape = 'u32[]', space=smem, size = 0x4, offset = 0x4, fixed_abs, tag = 'smem constant byte address 0x4 - core index']
  #allocation1 [shape = 'u32[144,128]{1,0:T(1,128)}', space=vmem, size = 0x12000, scoped, tag = 'internal scratch']
  #allocation2 [shape = 'f32[8,32]{1,0:T(8,128)}', space=vmem, size = 0x1000, scoped, tag = 'scratch operand']
  %s0 = inlined_call_operand.hbm [shape: f32[8,32], index: 0, kind: input, shape index: {}]
  %s1 = inlined_call_operand.hbm [shape: f32[8,32], index: 1, kind: input, shape index: {}]
  %s2 = inlined_call_operand.hbm [shape: f32[32,32], index: 2, kind: input, shape index: {}]
  %s3 = inlined_call_operand.vmem [shape: f32[8,1], index: 3, kind: output, shape index: {}]
  %s4 = sld [smem:[#allocation0]]
  $region42: #{tpu_custom_call.1} parent=0
    _
  %s6 = ssub.s32 1, %s4
  %s7 = scalar_select 0, %s6, %s4
  $region1: #{tpu_custom_call.1} parent=0
    #allocation3 [shape = 'u8[4096]{0}', space=vmem, size = 0x1000, scoped, tag = 'input window, operand 0, single buffered']
    #allocation4 [shape = 's32[1]{0}', space=sflag, size = 0x4, scoped, tag = 'scoped memory for tpu_custom_call.1']
    #allocation5 [shape = 'u8[4096]{0}', space=vmem, size = 0x1000, scoped, tag = 'input window, operand 1, single buffered']
    #allocation6 [shape = 's32[1]{0}', space=sflag, size = 0x4, scoped, tag = 'scoped memory for tpu_custom_call.1']
    #allocation7 [shape = 'u8[16384]{0}', space=vmem, size = 0x4000, scoped, tag = 'input window, operand 2, single buffered']
    %8 = vsyncpa [#allocation4], 0
    %9 = vsyncpa [#allocation6], 0
    // Predicated region
    $region2: #{tpu_custom_call.1} parent=1 // pred_check
      _
    $region3: #{tpu_custom_call.1} parent=1 // pred_check_branch
      %11 = sbr.rel (0) target = $region5
    $region4: #{tpu_custom_call.1} parent=1 // pred_region
      %s13 = ssub.s32 128, 128
      %14 = vsyncadd [#allocation4], %s13
      %s16 = sshll.u32 [#allocation3], 4
      %s17 = int_to_ptr.vmem [resolvable:$true] %s16
      %19 = dma.hbm_to_vmem [thread:$0]  %s0, 128, %s17, [#allocation4]
    $region5: #{tpu_custom_call.1} parent=1 // pred_fallthru
      _
    // Predicated region
    $region6: #{tpu_custom_call.1} parent=1 // pred_check
      _
    $region7: #{tpu_custom_call.1} parent=1 // pred_check_branch
      %21 = sbr.rel (0) target = $region9
    $region8: #{tpu_custom_call.1} parent=1 // pred_region
      %s23 = ssub.s32 128, 128
      %24 = vsyncadd [#allocation6], %s23
      %s26 = sshll.u32 [#allocation5], 4
      %s27 = int_to_ptr.vmem [resolvable:$true] %s26
      %29 = dma.hbm_to_vmem [thread:$0]  %s1, 128, %s27, [#allocation6]
    $region9: #{tpu_custom_call.1} parent=1 // pred_fallthru
      _
    // Predicated region
    $region10: #{tpu_custom_call.1} parent=1 // pred_check
      _
    $region11: #{tpu_custom_call.1} parent=1 // pred_check_branch
      %31 = sbr.rel (0) target = $region13
    $region12: #{tpu_custom_call.1} parent=1 // pred_region
      %s33 = ssub.s32 512, 512
      %34 = vsyncadd [#allocation6], %s33
      %s35 = sshll.u32 [#allocation7], 4
      %s36 = int_to_ptr.vmem [resolvable:$true] %s35
      %41 = dma.hbm_to_vmem [thread:$0]  %s2, 512, %s36, [#allocation6], 128, 128, 8
    $region13: #{tpu_custom_call.1} parent=1 // pred_fallthru
      _
    // Predicated region
    $region14: #{tpu_custom_call.1} parent=1 // pred_check
      _
    $region15: #{tpu_custom_call.1} parent=1 // pred_check_branch
      %43 = sbr.rel (0) target = $region17
    $region16: #{tpu_custom_call.1} parent=1 // pred_region
      %44 = dma.done [#allocation4], 128
    $region17: #{tpu_custom_call.1} parent=1 // pred_fallthru
      _
    // Predicated region
    $region18: #{tpu_custom_call.1} parent=1 // pred_check
      _
    $region19: #{tpu_custom_call.1} parent=1 // pred_check_branch
      %46 = sbr.rel (0) target = $region21
    $region20: #{tpu_custom_call.1} parent=1 // pred_region
      %47 = dma.done [#allocation6], 128
    $region21: #{tpu_custom_call.1} parent=1 // pred_fallthru
      _
    // Predicated region
    $region22: #{tpu_custom_call.1} parent=1 // pred_check
      _
    $region23: #{tpu_custom_call.1} parent=1 // pred_check_branch
      %49 = sbr.rel (0) target = $region25
    $region24: #{tpu_custom_call.1} parent=1 // pred_region
      %50 = dma.done [#allocation6], 512
    $region25: #{tpu_custom_call.1} parent=1 // pred_fallthru
      _
    %p51 = scmp.eq.s32.totalorder 0, 0
    // Predicated region
    $region26: #{tpu_custom_call.1} parent=1 // pred_check
      %p52 = pneg %p51
    $region27: #{tpu_custom_call.1} parent=1 // pred_check_branch
      %54 = sbr.rel (%p52) target = $region29
    $region28: #{tpu_custom_call.1} parent=1 // pred_region
      %vm55 = vcmask 261120
      %56 = vst.msk [vmem:[#allocation2] sm:$0xff] %vm55, 0.0
    $region29: #{tpu_custom_call.1} parent=1 // pred_fallthru
      _
    %v57 = vld [vmem:[#allocation2] sm:$0xff]
    %v58 = vld [vmem:[#allocation5] sm:$0xff]
    %v59 = vld [vmem:[#allocation7] sm:$0xff]
    %v60 = vld [vmem:[#allocation7 + $0x8] sm:$0xff]
    %v61 = vld [vmem:[#allocation7 + $0x10] sm:$0xff]
    %v62 = vld [vmem:[#allocation7 + $0x18] sm:$0xff]
    %vm63 = vcmask 261120
    %v65 = vsel %vm63, %v58, 0
    %67 = vmatprep.subr.mxu0 0.0
    %68 = vmatpush1.msra.mxu0 %v59
    %69 = vmatprep.subr.mxu0 0.0
    %70 = vmatpush1.msra.mxu0 %v60
    %71 = vmatprep.subr.mxu0 0.0
    %72 = vmatpush1.msra.mxu0 %v61
    %73 = vmatprep.subr.mxu0 0.0
    %74 = vmatpush1.msra.mxu0 %v62
    %75 = vmatprep.subr.mxu0 0.0
    %76 = vmatpush1.msra.mxu0 0.0
    %77 = vmatprep.subr.mxu0 0.0
    %78 = vmatpush1.msra.mxu0 0.0
    %79 = vmatprep.subr.mxu0 0.0
    %80 = vmatpush1.msra.mxu0 0.0
    %81 = vmatprep.subr.mxu0 0.0
    %82 = vmatpush1.msra.mxu0 0.0
    %83 = vmatprep.subr.mxu0 0.0
    %84 = vmatpush1.msra.mxu0 0.0
    %85 = vmatprep.subr.mxu0 0.0
    %86 = vmatpush1.msra.mxu0 0.0
    %87 = vmatprep.subr.mxu0 0.0
    %88 = vmatpush1.msra.mxu0 0.0
    %89 = vmatprep.subr.mxu0 0.0
    %90 = vmatpush1.msra.mxu0 0.0
    %91 = vmatprep.subr.mxu0 0.0
    %92 = vmatpush1.msra.mxu0 0.0
    %93 = vmatprep.subr.mxu0 0.0
    %94 = vmatpush1.msra.mxu0 0.0
    %95 = vmatprep.subr.mxu0 0.0
    %96 = vmatpush1.msra.mxu0 0.0
    %97 = vmatprep.subr.mxu0 0.0
    %98 = vmatpush1.msra.mxu0 0.0
    %99 = vmatprep.subr.mxu0 0.0
    %100 = vmatpush1.msra.mxu0 0.0
    %101 = vmatprep.subr.mxu0 0.0
    %102 = vmatpush1.msra.mxu0 0.0
    %103 = vmatprep.subr.mxu0 0.0
    %104 = vmatpush1.msra.mxu0 0.0
    %105 = vmatprep.subr.mxu0 0.0
    %106 = vmatpush1.msra.mxu0 0.0
    %107 = vmatprep.subr.mxu0 0.0
    %108 = vmatpush1.msra.mxu0 0.0
    %109 = vmatprep.subr.mxu0 0.0
    %110 = vmatpush1.msra.mxu0 0.0
    %111 = vmatprep.subr.mxu0 0.0
    %112 = vmatpush1.msra.mxu0 0.0
    %113 = vmatprep.subr.mxu0 0.0
    %114 = vmatpush1.msra.mxu0 0.0
    %115 = vmatprep.subr.mxu0 0.0
    %116 = vmatpush1.msra.mxu0 0.0
    %117 = vmatprep.subr.mxu0 0.0
    %118 = vmatpush1.msra.mxu0 0.0
    %119 = vmatprep.subr.mxu0 0.0
    %120 = vmatpush1.msra.mxu0 0.0
    %121 = vmatprep.subr.mxu0 0.0
    %122 = vmatpush1.msra.mxu0 0.0
    %123 = vmatprep.subr.mxu0 0.0
    %124 = vmatpush1.msra.mxu0 0.0
    %125 = vmatprep.subr.mxu0 0.0
    %126 = vmatpush1.msra.mxu0 0.0
    %127 = vmatprep.subr.mxu0 0.0
    %128 = vmatpush1.msra.mxu0 0.0
    %129 = vmatprep.subr.mxu0 0.0
    %130 = vmatpush1.msra.mxu0 0.0
    %131 = vmatprep.mubr.f32.mxu0 0.0
    %132 = vmatmul.mubr.f32.gmra.mrb[0].mxu0 %v65
    %v133 = vpop.f32.mrb[0].mxu0
    %v134 = vadd.f32 0.0, %v133
    %v135 = vpop.f32.mrb[0].mxu0
    %136 = vdwg.mxu0
    %v137 = vadd.f32 %v57, %v134
    %138 = vst.msk [vmem:[#allocation2] sm:$0xff] %vm63, %v137
    // Predicated region
    $region30: #{tpu_custom_call.1} parent=1 // pred_check
      %p139 = pneg %p51
    $region31: #{tpu_custom_call.1} parent=1 // pred_check_branch
      %141 = sbr.rel (%p139) target = $region33
    $region32: #{tpu_custom_call.1} parent=1 // pred_region
      %v142 = vld [vmem:[#allocation3] sm:$0xff]
      %v143 = vld [vmem:[#allocation2] sm:$0xff]
      %v144 = vmul.f32 %v142, %v143
      %v145 = vsel %vm63, %v144, 0.0
      %146 = vadd.xlane.f32.xlu0 %v145
      %v147 = vpop.xlane.xlu0 %146
      %v148 = vmul.f32 %v147, 0.33333334
      %vm149 = vcmask 7168
      %150 = vst.msk [vmem:[%s3] sm:$0xff] %vm149, %v148
    $region33: #{tpu_custom_call.1} parent=1 // pred_fallthru
      _
    // Predicated region
    $region34: #{tpu_custom_call.1} parent=1 // pred_check
      _
    $region35: #{tpu_custom_call.1} parent=1 // pred_check_branch
      %152 = sbr.rel (0) target = $region37
    $region36: #{tpu_custom_call.1} parent=1 // pred_region
      _
    $region37: #{tpu_custom_call.1} parent=1 // pred_fallthru
      _
    // Predicated region
    $region38: #{tpu_custom_call.1} parent=1 // pred_check
      _
    $region39: #{tpu_custom_call.1} parent=1 // pred_check_branch
      %154 = sbr.rel (0) target = $region41
    $region40: #{tpu_custom_call.1} parent=1 // pred_region
      _
    $region41: #{tpu_custom_call.1} parent=1 // pred_fallthru
      _
    %155 = vsyncpa [#allocation4], 1
    %156 = vsyncpa [#allocation6], 1

</llo_original>
